<compile_context>
chip_gen: v6e
topology: v6e:2x2x1
jax: 0.10.0
libtpu: 0.0.40
codegen_flags: <defaults>
</compile_context>

<pallas_src>
import functools

import numpy as np
import jax
import jax.numpy as jnp
from jax import lax
from jax.experimental import pallas as pl
from jax.experimental.pallas import tpu as pltpu

_LN_EPS = 1e-5                    # torch nn.LayerNorm default
_ROW_TILE = 512                   # rows per grid step for the row-tiled kernels
_VMEM_LIMIT = 48 * 1024 * 1024    # fits v7x's 64 MiB physical, lifts v5e's 16 MiB default

# Set to jnp.bfloat16 on v6e/v7x to hit the bf16-native MXU (inputs cast at the
# matmul only; LayerNorm / SiLU / masking / accumulation stay in float32).
MATMUL_DTYPE = jnp.float32


def _round_up(x, m):
    return (x + m - 1) // m * m


def _mm(a, b):
    """MXU matmul with f32 accumulation; inputs optionally cast to MATMUL_DTYPE."""
    return jnp.dot(a.astype(MATMUL_DTYPE), b.astype(MATMUL_DTYPE),
                   preferred_element_type=jnp.float32)


def _small_mm(x, w):
    """Unrolled lane-dense matmul for tiny contraction dims (<8 columns)."""
    acc = x[:, 0:1] * w[0:1, :]
    for j in range(1, w.shape[0]):
        acc = acc + x[:, j:j + 1] * w[j:j + 1, :]
    return acc


# --------------------------------------------------------------------------
# Pallas kernel 1: fused [concat inputs] -> [LayerNorm] -> [ReLU] -> matmul -> (+bias)
# --------------------------------------------------------------------------
def _proj_kernel(*refs, n_x, use_ln, use_affine, use_relu, use_bias, small_k):
    idx = n_x
    xs = [refs[i][...].astype(jnp.float32) for i in range(n_x)]
    x = xs[0] if n_x == 1 else jnp.concatenate(xs, axis=-1)
    if use_affine:
        g_ref, b_ref = refs[idx], refs[idx + 1]
        idx += 2
    if use_ln:
        mu = jnp.mean(x, axis=-1, keepdims=True)
        var = jnp.mean(jnp.square(x - mu), axis=-1, keepdims=True)
        x = (x - mu) * lax.rsqrt(var + _LN_EPS)
        if use_affine:
            x = x * g_ref[...] + b_ref[...]
    if use_relu:
        x = jnp.maximum(x, 0.0)
    w_ref = refs[idx]
    idx += 1
    w = w_ref[...].astype(jnp.float32)
    y = _small_mm(x, w) if small_k else _mm(x, w)
    if use_bias:
        y = y + refs[idx][...].astype(jnp.float32)
        idx += 1
    o_ref = refs[-1]
    o_ref[...] = y.astype(o_ref.dtype)


def fused_proj(xs, w, *, ln=False, ln_g=None, ln_b=None, bias=None, relu=False,
               row_tile=_ROW_TILE):
    """y = Linear( [LN | ReLU | id]( concat(xs, -1) ) ) (+bias).

    xs: array or list of arrays sharing leading dims; w: (sum(Din_i), Dout).
    """
    if not isinstance(xs, (list, tuple)):
        xs = [xs]
    lead = xs[0].shape[:-1]
    dins = [x.shape[-1] for x in xs]
    din = sum(dins)
    dout = w.shape[-1]

    flat = [x.reshape(-1, x.shape[-1]).astype(jnp.float32) for x in xs]
    m = flat[0].shape[0]
    m8 = _round_up(m, 8)
    if m8 != m:  # only pad to sublane multiple (never to a full tile)
        flat = [jnp.pad(f, ((0, m8 - m), (0, 0))) for f in flat]
    tm = min(_round_up(row_tile, 8), m8)
    grid = pl.cdiv(m8, tm)

    use_ln = ln or (ln_g is not None)
    use_affine = ln_g is not None
    use_bias = bias is not None

    operands = list(flat)
    in_specs = [pl.BlockSpec((tm, d_i), lambda i: (i, 0)) for d_i in dins]
    if use_affine:
        operands += [ln_g.reshape(1, din).astype(jnp.float32),
                     ln_b.reshape(1, din).astype(jnp.float32)]
        in_specs += [pl.BlockSpec((1, din), lambda i: (0, 0)),
                     pl.BlockSpec((1, din), lambda i: (0, 0))]
    operands.append(w.astype(jnp.float32))
    in_specs.append(pl.BlockSpec((din, dout), lambda i: (0, 0)))
    if use_bias:
        operands.append(bias.reshape(1, dout).astype(jnp.float32))
        in_specs.append(pl.BlockSpec((1, dout), lambda i: (0, 0)))

    kernel = functools.partial(_proj_kernel, n_x=len(flat), use_ln=use_ln,
                               use_affine=use_affine, use_relu=relu,
                               use_bias=use_bias, small_k=(din < 8))
    out = pl.pallas_call(
        kernel,
        out_shape=jax.ShapeDtypeStruct((m8, dout), jnp.float32),
        grid_spec=pltpu.PrefetchScalarGridSpec(
            num_scalar_prefetch=0,
            grid=(grid,),
            in_specs=in_specs,
            out_specs=pl.BlockSpec((tm, dout), lambda i: (i, 0)),
        ),
        compiler_params=pltpu.CompilerParams(
            dimension_semantics=("parallel",),
            vmem_limit_bytes=_VMEM_LIMIT),
    )(*operands)
    return out[:m].reshape(*lead, dout)


def stacked_ln_heads(x, layers, *, row_tile=_ROW_TILE):
    """Fused equivalent of torch.cat([Linear(LN(x)) for layer in layers], -1).

    LayerNorm statistics are computed once; each layer's gamma is folded into
    its (no-bias) weight and beta into a bias row, so the concatenated bias
    tensor is produced by a single pallas_call / single HBM pass over x.
    """
    w_stack = jnp.concatenate([l["g"][:, None] * l["w"] for l in layers], axis=-1)
    b_stack = jnp.concatenate([l["b"] @ l["w"] for l in layers], axis=-1)
    return fused_proj(x, w_stack, ln=True, bias=b_stack, row_tile=row_tile)


# --------------------------------------------------------------------------
# Pallas kernel 2: Transition (LN -> SwiGLU (fc1||fc2 fused) -> fc3) + residual
# --------------------------------------------------------------------------
def _transition_kernel(x_ref, g_ref, b_ref, w12_ref, w3_ref, o_ref, *, hdim):
    x = x_ref[...].astype(jnp.float32)
    mu = jnp.mean(x, axis=-1, keepdims=True)
    var = jnp.mean(jnp.square(x - mu), axis=-1, keepdims=True)
    h = (x - mu) * lax.rsqrt(var + _LN_EPS)
    h = h * g_ref[...] + b_ref[...]
    au = _mm(h, w12_ref[...])                  # (tm, 2*hdim): one MXU pass
    a = au[:, :hdim]
    u = au[:, hdim:]
    gated = (a * jax.nn.sigmoid(a)) * u        # SiLU(a) * u
    y = _mm(gated, w3_ref[...])
    o_ref[...] = (x + y).astype(o_ref.dtype)   # residual


def transition_residual(x, g, b, w1, w2, w3, *, row_tile=_ROW_TILE):
    d = x.shape[-1]
    hdim = w1.shape[-1]
    lead = x.shape[:-1]
    x2 = x.reshape(-1, d).astype(jnp.float32)
    m = x2.shape[0]
    m8 = _round_up(m, 8)
    if m8 != m:
        x2 = jnp.pad(x2, ((0, m8 - m), (0, 0)))
    tm = min(_round_up(row_tile, 8), m8)
    grid = pl.cdiv(m8, tm)
    w12 = jnp.concatenate([w1, w2], axis=-1).astype(jnp.float32)
    out = pl.pallas_call(
        functools.partial(_transition_kernel, hdim=hdim),
        out_shape=jax.ShapeDtypeStruct((m8, d), jnp.float32),
        grid_spec=pltpu.PrefetchScalarGridSpec(
            num_scalar_prefetch=0,
            grid=(grid,),
            in_specs=[
                pl.BlockSpec((tm, d), lambda i: (i, 0)),
                pl.BlockSpec((1, d), lambda i: (0, 0)),
                pl.BlockSpec((1, d), lambda i: (0, 0)),
                pl.BlockSpec((d, 2 * hdim), lambda i: (0, 0)),
                pl.BlockSpec((hdim, d), lambda i: (0, 0)),
            ],
            out_specs=pl.BlockSpec((tm, d), lambda i: (i, 0)),
        ),
        compiler_params=pltpu.CompilerParams(
            dimension_semantics=("parallel",),
            vmem_limit_bytes=_VMEM_LIMIT),
    )(x2, g.reshape(1, d).astype(jnp.float32), b.reshape(1, d).astype(jnp.float32),
      w12, w3.astype(jnp.float32))
    return out[:m].reshape(*lead, d)


# --------------------------------------------------------------------------
# Pallas kernel 3: fused atom-pair pipeline, one window (b,k) per grid step.
#   p = (W_pair @ [d, 1/(1+|d|^2), v]) * v
#   p += z_to_p (gathered)           p += ReLU(c_q) @ Wq  (broadcast over H)
#   p += ReLU(c_k) @ Wk (bcast / W)  p += p_mlp(p)  (ReLU->Lin x3, residual)
# p is written to HBM exactly once.
# --------------------------------------------------------------------------
def _pair_fuse_kernel(d_ref, v_ref, zp_ref, cq_ref, ck_ref,
                      wpair_ref, wq_ref, wk_ref, w1_ref, w2_ref, w3_ref,
                      o_ref, *, W, H):
    f32 = jnp.float32
    d = d_ref[0].astype(f32)                          # (W*H, 3)
    v = v_ref[0].astype(f32)                          # (W*H, 1)
    dn = 1.0 / (1.0 + jnp.sum(d * d, axis=-1, keepdims=True))
    wpair = wpair_ref[...].astype(f32)                # (5, az)
    az = wpair.shape[-1]

    # unrolled lane-dense "matmul" over the 5 pair-feature columns [dx,dy,dz,dn,v]
    cols = (d[:, 0:1], d[:, 1:2], d[:, 2:3], dn, v)
    p = cols[0] * wpair[0:1, :]
    for j in range(1, 5):
        p = p + cols[j] * wpair[j:j + 1, :]
    p = p * v
    p = p + zp_ref[0].astype(f32)                     # z -> p contribution

    cq = jnp.maximum(cq_ref[0].astype(f32), 0.0)      # (W, atom_s)
    ck = jnp.maximum(ck_ref[0].astype(f32), 0.0)      # (H, atom_s)
    pq = _mm(cq, wq_ref[...])                         # (W, az)
    pk = _mm(ck, wk_ref[...])                         # (H, az)
    p = p + jnp.broadcast_to(pq[:, None, :], (W, H, az)).reshape(W * H, az)
    p = p + jnp.broadcast_to(pk[None, :, :], (W, H, az)).reshape(W * H, az)

    t = _mm(jnp.maximum(p, 0.0), w1_ref[...])
    t = _mm(jnp.maximum(t, 0.0), w2_ref[...])
    t = _mm(jnp.maximum(t, 0.0), w3_ref[...])
    o_ref[0] = (p + t).astype(o_ref.dtype)


def fused_pair_block(d, v, zp, cq, ck, wpair, wq, wk, w1, w2, w3, *, W, H):
    """d/v/zp: (B*K, W*H, {3,1,az});  cq: (B*K, W, as);  ck: (B*K, H, as)."""
    BK, WH, _ = d.shape
    az = w1.shape[0]
    as_ = wq.shape[0]
    f32 = jnp.float32
    win = lambda i: (i, 0, 0)
    full = lambda i: (0, 0)
    out = pl.pallas_call(
        functools.partial(_pair_fuse_kernel, W=W, H=H),
        out_shape=jax.ShapeDtypeStruct((BK, WH, az), jnp.float32),
        grid_spec=pltpu.PrefetchScalarGridSpec(
            num_scalar_prefetch=0,
            grid=(BK,),
            in_specs=[
                pl.BlockSpec((1, WH, 3), win),
                pl.BlockSpec((1, WH, 1), win),
                pl.BlockSpec((1, WH, az), win),
                pl.BlockSpec((1, W, as_), win),
                pl.BlockSpec((1, H, as_), win),
                pl.BlockSpec((5, az), full),
                pl.BlockSpec((as_, az), full),
                pl.BlockSpec((as_, az), full),
                pl.BlockSpec((az, az), full),
                pl.BlockSpec((az, az), full),
                pl.BlockSpec((az, az), full),
            ],
            out_specs=pl.BlockSpec((1, WH, az), win),
        ),
        compiler_params=pltpu.CompilerParams(
            dimension_semantics=("parallel",),
            vmem_limit_bytes=_VMEM_LIMIT),
    )(d.astype(f32), v.astype(f32), zp.astype(f32), cq.astype(f32), ck.astype(f32),
      wpair.astype(f32), wq.astype(f32), wk.astype(f32),
      w1.astype(f32), w2.astype(f32), w3.astype(f32))
    return out


# --------------------------------------------------------------------------
# Windowing helpers (AtomEncoder "to_keys") -- plain JAX glue
# --------------------------------------------------------------------------
def get_indexing_matrix(K, W, H):
    assert W % 2 == 0
    assert H % (W // 2) == 0
    h = H // (W // 2)
    assert h % 2 == 0
    ar = jnp.arange(2 * K)
    index = jnp.clip((ar[None, :] - ar[:, None]) + h // 2, 0, h + 1)
    index = index.reshape(K, 2, 2 * K)[:, 0, :]                   # (K, 2K)
    onehot = jax.nn.one_hot(index, h + 2, dtype=jnp.float32)[..., 1:-1]
    onehot = jnp.transpose(onehot, (1, 0, 2))                     # (2K, K, h)
    return onehot.reshape(2 * K, h * K)


def single_to_keys(single, indexing_matrix, W, H):
    # TODO(synk): this windowed one-hot einsum (returned as part of the
    #             `to_keys` closure interface) could become a Pallas
    #             scalar-prefetch gather kernel.
    B, N, D = single.shape
    K = N // W
    single = single.reshape(B, 2 * K, W // 2, D)
    out = jnp.einsum("bjid,jk->bkid", single, indexing_matrix)
    return out.reshape(B, K, H, D)


# --------------------------------------------------------------------------
# Module forward passes
# --------------------------------------------------------------------------
def pairwise_conditioning_apply(pp, z_trunk, rel_pos):
    # concat happens inside the kernel (no materialized (…, 2*token_z) tensor)
    z = fused_proj([z_trunk, rel_pos], pp["init_w"],
                   ln_g=pp["init_g"], ln_b=pp["init_b"])
    for t in pp["transitions"]:
        z = transition_residual(z, t["g"], t["b"], t["w1"], t["w2"], t["w3"])
    return z


def atom_encoder_apply(ap, feats, s_trunk, z, W, H):
    ref_pos = feats["ref_pos"].astype(jnp.float32)           # (B, N, 3)
    atom_mask = feats["atom_pad_mask"].astype(jnp.float32)    # (B, N), 0/1
    # float carry of integer uids is exact for uid < 2^24 (guarded assumption)
    atom_uid = feats["ref_space_uid"].astype(jnp.float32)     # (B, N)
    B, N, _ = ref_pos.shape
    K = N // W

    idx_mat = get_indexing_matrix(K, W, H)
    to_keys = functools.partial(single_to_keys, indexing_matrix=idx_mat, W=W, H=H)

    atom_feats = jnp.concatenate([
        ref_pos,
        feats["ref_charge"][..., None].astype(jnp.float32),
        atom_mask[..., None],
        feats["ref_element"].astype(jnp.float32),
    ], axis=-1)                                               # (B, N, atom_feature_dim)
    c = fused_proj(atom_feats, ap["embed_atom_w"], bias=ap["embed_atom_b"])
    q = c

    # -- geometry + validity mask (small tensors, plain JAX) --
    pos_q = ref_pos.reshape(B, K, W, 1, 3)
    pos_k = to_keys(ref_pos).reshape(B, K, 1, H, 3)
    d = (pos_k - pos_q).reshape(B * K, W * H, 3)              # d_norm computed in-kernel

    mask_q = atom_mask.reshape(B, K, W, 1)
    mask_k = to_keys(atom_mask[..., None]).reshape(B, K, 1, H)
    uid_q = atom_uid.reshape(B, K, W, 1)
    uid_k = to_keys(atom_uid[..., None]).reshape(B, K, 1, H)
    v = (mask_q * mask_k * (uid_q == uid_k).astype(jnp.float32))
    v = v.reshape(B * K, W * H, 1)

    # -- structure_prediction=True branch --
    # atom_to_token is one-hot (or all-zero for padded atoms), so the dense
    # one-hot contractions are replaced by exact gathers (argmax + validity).
    a2t = feats["atom_to_token"].astype(jnp.float32)          # (B, N, T)
    tq = jnp.argmax(a2t, axis=-1)                             # (B, N)
    vq = jnp.max(a2t, axis=-1)                                # exactly 1.0 / 0.0

    s2c = fused_proj(s_trunk, ap["s_to_c_w"], ln_g=ap["s_to_c_g"], ln_b=ap["s_to_c_b"])
    s2c_g = s2c[jnp.arange(B)[:, None], tq] * vq[..., None]   # (B, N, atom_s)
    c = c + s2c_g

    a2t_k = to_keys(a2t)                                      # (B, K, H, T)
    tk = jnp.argmax(a2t_k, axis=-1)                           # (B, K, H)
    vk = jnp.max(a2t_k, axis=-1)
    z2p = fused_proj(z, ap["z_to_p_w"], ln_g=ap["z_to_p_g"], ln_b=ap["z_to_p_b"])
    bidx = jnp.arange(B)[:, None, None, None]
    tq_w = tq.reshape(B, K, W)
    zp = z2p[bidx, tq_w[:, :, :, None], tk[:, :, None, :]]    # (B, K, W, H, az)
    zp = zp * (vq.reshape(B, K, W)[:, :, :, None, None] * vk[:, :, None, :, None])
    zp = zp.reshape(B * K, W * H, -1)

    cq = c.reshape(B * K, W, c.shape[-1])
    ck = to_keys(c).reshape(B * K, H, c.shape[-1])

    wpair = jnp.concatenate(
        [ap["pair_pos_w"], ap["pair_dist_w"], ap["pair_mask_w"]], axis=0)  # (5, az)
    p = fused_pair_block(d, v, zp, cq, ck, wpair,
                         ap["c2p_q_w"], ap["c2p_k_w"],
                         ap["pmlp_w1"], ap["pmlp_w2"], ap["pmlp_w3"], W=W, H=H)
    p = p.reshape(B, K, W, H, -1)
    return q, c, p, to_keys


def diffusion_conditioning_apply(params, s_trunk, z_trunk,
                                 relative_position_encoding, feats, cfg):
    z = pairwise_conditioning_apply(params["pairwise"], z_trunk,
                                    relative_position_encoding)
    q, c, p, to_keys = atom_encoder_apply(
        params["atom_encoder"], feats, s_trunk, z,
        cfg["atoms_per_window_queries"], cfg["atoms_per_window_keys"])

    atom_enc_bias = stacked_ln_heads(p, params["atom_enc_proj_z"])
    atom_dec_bias = stacked_ln_heads(p, params["atom_dec_proj_z"])
    token_trans_bias = stacked_ln_heads(z, params["token_trans_proj_z"])
    return q, c, to_keys, atom_enc_bias, atom_dec_bias, token_trans_bias


# --------------------------------------------------------------------------
# Deterministic synthetic parameter init
# --------------------------------------------------------------------------
def _linear_w(key, din, dout):
    return jax.random.normal(key, (din, dout), jnp.float32) / np.sqrt(din)


def _ln_params(key, dim):
    k1, k2 = jax.random.split(key)
    g = 1.0 + 0.1 * jax.random.normal(k1, (dim,), jnp.float32)
    b = 0.1 * jax.random.normal(k2, (dim,), jnp.float32)
    return g, b


def init_params(key, cfg):
    ks = iter(jax.random.split(key, 512))
    nk = lambda: next(ks)
    tz, ts = cfg["token_z"], cfg["token_s"]
    az, as_ = cfg["atom_z"], cfg["atom_s"]

    g, b = _ln_params(nk(), 2 * tz)
    pairwise = {"init_g": g, "init_b": b,
                "init_w": _linear_w(nk(), 2 * tz, tz), "transitions": []}
    hid = 2 * tz
    for _ in range(cfg["conditioning_transition_layers"]):
        tg, tb = _ln_params(nk(), tz)
        pairwise["transitions"].append({
            "g": tg, "b": tb,
            "w1": _linear_w(nk(), tz, hid),
            "w2": _linear_w(nk(), tz, hid),
            "w3": _linear_w(nk(), hid, tz)})

    s2c_g, s2c_b = _ln_params(nk(), ts)
    z2p_g, z2p_b = _ln_params(nk(), tz)
    atom_encoder = {
        "embed_atom_w": _linear_w(nk(), cfg["atom_feature_dim"], as_),
        "embed_atom_b": 0.1 * jax.random.normal(nk(), (as_,), jnp.float32),
        "pair_pos_w": _linear_w(nk(), 3, az),
        "pair_dist_w": _linear_w(nk(), 1, az),
        "pair_mask_w": _linear_w(nk(), 1, az),
        "s_to_c_g": s2c_g, "s_to_c_b": s2c_b, "s_to_c_w": _linear_w(nk(), ts, as_),
        "z_to_p_g": z2p_g, "z_to_p_b": z2p_b, "z_to_p_w": _linear_w(nk(), tz, az),
        "c2p_q_w": _linear_w(nk(), as_, az),
        "c2p_k_w": _linear_w(nk(), as_, az),
        "pmlp_w1": _linear_w(nk(), az, az),
        "pmlp_w2": _linear_w(nk(), az, az),
        "pmlp_w3": _linear_w(nk(), az, az),
    }

    def proj_list(depth, dim, heads):
        out = []
        for _ in range(depth):
            g_, b_ = _ln_params(nk(), dim)
            out.append({"g": g_, "b": b_, "w": _linear_w(nk(), dim, heads)})
        return out

    return {
        "pairwise": pairwise,
        "atom_encoder": atom_encoder,
        "atom_enc_proj_z": proj_list(cfg["atom_encoder_depth"], az,
                                     cfg["atom_encoder_heads"]),
        "atom_dec_proj_z": proj_list(cfg["atom_decoder_depth"], az,
                                     cfg["atom_decoder_heads"]),
        "token_trans_proj_z": proj_list(cfg["token_transformer_depth"], tz,
                                        cfg["token_transformer_heads"]),
    }


# --------------------------------------------------------------------------
# Demo
# --------------------------------------------------------------------------
if __name__ == "__main__":
    cfg = dict(
        token_s=32, token_z=16, atom_s=16, atom_z=8,
        atoms_per_window_queries=4, atoms_per_window_keys=8,
        atom_encoder_depth=3, atom_encoder_heads=4,
        token_transformer_depth=4, token_transformer_heads=8,
        atom_decoder_depth=3, atom_decoder_heads=4,
        atom_feature_dim=16, conditioning_transition_layers=2,
        use_no_atom_char=True,   # keep synthetic atom features small
    )
    B, T, N = 2, 8, 16           # batch, tokens, atoms (N % W == 0)

    key = jax.random.PRNGKey(0)
    kparams, kdata = jax.random.split(key)
    params = init_params(kparams, cfg)

    ks = iter(jax.random.split(kdata, 16))
    nk = lambda: next(ks)
    s_trunk = jax.random.normal(nk(), (B, T, cfg["token_s"]), jnp.float32)
    z_trunk = jax.random.normal(nk(), (B, T, T, cfg["token_z"]), jnp.float32)
    rel_pos = jax.random.normal(nk(), (B, T, T, cfg["token_z"]), jnp.float32)

    elem_dim = cfg["atom_feature_dim"] - 5      # 3(pos) + 1(charge) + 1(mask)
    ref_pos = jax.random.normal(nk(), (B, N, 3), jnp.float32)
    ref_charge = jax.random.normal(nk(), (B, N), jnp.float32)
    ref_element = jax.random.normal(nk(), (B, N, elem_dim), jnp.float32)
    atom_pad_mask = jnp.ones((B, N), jnp.float32).at[:, -2:].set(0.0)
    tok_idx = jnp.arange(N) // (N // T)
    ref_space_uid = jnp.broadcast_to(tok_idx, (B, N)).astype(jnp.int32)
    atom_to_token = jnp.broadcast_to(
        jax.nn.one_hot(tok_idx, T, dtype=jnp.float32), (B, N, T))

    feats = {
        "ref_pos": ref_pos,
        "ref_charge": ref_charge,
        "ref_element": ref_element,
        "atom_pad_mask": atom_pad_mask,
        "ref_space_uid": ref_space_uid,
        "atom_to_token": atom_to_token,
    }

    q, c, to_keys, atom_enc_bias, atom_dec_bias, token_trans_bias = \
        diffusion_conditioning_apply(params, s_trunk, z_trunk, rel_pos, feats, cfg)

    outs = (q, c, atom_enc_bias, atom_dec_bias, token_trans_bias)
    jax.block_until_ready(outs)

    assert q.shape == (B, N, cfg["atom_s"])
    assert c.shape == (B, N, cfg["atom_s"])
    K = N // cfg["atoms_per_window_queries"]
    W, H = cfg["atoms_per_window_queries"], cfg["atoms_per_window_keys"]
    assert atom_enc_bias.shape == (B, K, W, H,
                                   cfg["atom_encoder_depth"] * cfg["atom_encoder_heads"])
    assert atom_dec_bias.shape == (B, K, W, H,
                                   cfg["atom_decoder_depth"] * cfg["atom_decoder_heads"])
    assert token_trans_bias.shape == (B, T, T,
                                      cfg["token_transformer_depth"] * cfg["token_transformer_heads"])
    assert callable(to_keys)
    for o in outs:
        assert bool(jnp.all(jnp.isfinite(o)))

    print("KERNEL_OK")
</pallas_src>

<mosaic_0001>
module attributes {stable_mosaic.version = 11 : i64} {
  func.func @_proj_kernel(%arg0: i32, %arg1: memref<128x16xf32, #tpu.memory_space<vmem>>, %arg2: memref<128x16xf32, #tpu.memory_space<vmem>>, %arg3: memref<1x32xf32, #tpu.memory_space<vmem>>, %arg4: memref<1x32xf32, #tpu.memory_space<vmem>>, %arg5: memref<32x16xf32, #tpu.memory_space<vmem>>, %arg6: memref<128x16xf32, #tpu.memory_space<vmem>>) attributes {dimension_semantics = [#tpu.dimension_semantics<parallel>], iteration_bounds = array<i64: 1>, scalar_prefetch = 0 : i64, scratch_operands = 0 : i64, tpu.core_type = #tpu.core_type<tc>, window_params = [{transform_indices = @transform_0, window_bounds = array<i64: 128, 16>}, {transform_indices = @transform_1, window_bounds = array<i64: 128, 16>}, {pipeline_mode = #tpu.pipeline_mode<synchronous>, transform_indices = @transform_2, window_bounds = array<i64: 1, 32>}, {pipeline_mode = #tpu.pipeline_mode<synchronous>, transform_indices = @transform_3, window_bounds = array<i64: 1, 32>}, {pipeline_mode = #tpu.pipeline_mode<synchronous>, transform_indices = @transform_4, window_bounds = array<i64: 32, 16>}, {transform_indices = @transform_5, window_bounds = array<i64: 128, 16>}]} {
    %c0 = arith.constant 0 : index
    %c0_0 = arith.constant 0 : index
    %0 = vector.load %arg1[%c0, %c0_0] : memref<128x16xf32, #tpu.memory_space<vmem>>, vector<128x16xf32>
    %c0_1 = arith.constant 0 : index
    %c0_2 = arith.constant 0 : index
    %1 = vector.load %arg2[%c0_1, %c0_2] : memref<128x16xf32, #tpu.memory_space<vmem>>, vector<128x16xf32>
    %2 = tpu.concatenate %0, %1 in 1 : vector<128x16xf32>, vector<128x16xf32> -> vector<128x32xf32>
    %cst = arith.constant dense<0.000000e+00> : vector<128xf32>
    %3 = vector.multi_reduction <add>, %2, %cst [1] : vector<128x32xf32> to vector<128xf32>
    %4 = vector.shape_cast %3 : vector<128xf32> to vector<128x1xf32>
    %cst_3 = arith.constant 3.200000e+01 : f32
    %5 = vector.broadcast %cst_3 : f32 to vector<128x1xf32>
    %6 = arith.divf %4, %5 : vector<128x1xf32>
    %7 = vector.broadcast %6 : vector<128x1xf32> to vector<128x32xf32>
    %8 = arith.subf %2, %7 : vector<128x32xf32>
    %9 = arith.mulf %8, %8 : vector<128x32xf32>
    %cst_4 = arith.constant dense<0.000000e+00> : vector<128xf32>
    %10 = vector.multi_reduction <add>, %9, %cst_4 [1] : vector<128x32xf32> to vector<128xf32>
    %11 = vector.shape_cast %10 : vector<128xf32> to vector<128x1xf32>
    %cst_5 = arith.constant 3.200000e+01 : f32
    %12 = vector.broadcast %cst_5 : f32 to vector<128x1xf32>
    %13 = arith.divf %11, %12 : vector<128x1xf32>
    %14 = vector.broadcast %6 : vector<128x1xf32> to vector<128x32xf32>
    %15 = arith.subf %2, %14 : vector<128x32xf32>
    %cst_6 = arith.constant 9.99999974E-6 : f32
    %16 = vector.broadcast %cst_6 : f32 to vector<128x1xf32>
    %17 = arith.addf %13, %16 : vector<128x1xf32>
    %18 = math.rsqrt %17 : vector<128x1xf32>
    %19 = vector.broadcast %18 : vector<128x1xf32> to vector<128x32xf32>
    %20 = arith.mulf %15, %19 : vector<128x32xf32>
    %c0_7 = arith.constant 0 : index
    %c0_8 = arith.constant 0 : index
    %21 = vector.load %arg3[%c0_7, %c0_8] : memref<1x32xf32, #tpu.memory_space<vmem>>, vector<1x32xf32>
    %22 = vector.broadcast %21 : vector<1x32xf32> to vector<128x32xf32>
    %23 = arith.mulf %20, %22 : vector<128x32xf32>
    %c0_9 = arith.constant 0 : index
    %c0_10 = arith.constant 0 : index
    %24 = vector.load %arg4[%c0_9, %c0_10] : memref<1x32xf32, #tpu.memory_space<vmem>>, vector<1x32xf32>
    %25 = vector.broadcast %24 : vector<1x32xf32> to vector<128x32xf32>
    %26 = arith.addf %23, %25 : vector<128x32xf32>
    %c0_11 = arith.constant 0 : index
    %c0_12 = arith.constant 0 : index
    %27 = vector.load %arg5[%c0_11, %c0_12] : memref<32x16xf32, #tpu.memory_space<vmem>>, vector<32x16xf32>
    %cst_13 = arith.constant dense<0.000000e+00> : vector<128x16xf32>
    %28 = tpu.matmul %26, %27, %cst_13 {dimension_numbers = #tpu.dot_dimension_numbers<[1], [0], [0], [1], [0, 0, 1, 1], [], []>} : vector<128x32xf32>, vector<32x16xf32>, vector<128x16xf32> -> vector<128x16xf32>
    %c0_14 = arith.constant 0 : index
    %c0_15 = arith.constant 0 : index
    %29 = vector.load %arg6[%c0_14, %c0_15] : memref<128x16xf32, #tpu.memory_space<vmem>>, vector<128x16xf32>
    tpu.vector_store %arg6[%c0_14, %c0_15], %28 {strides = array<i32>} : memref<128x16xf32, #tpu.memory_space<vmem>>, vector<128x16xf32>,
    return
  }
  func.func @transform_0(%arg0: i32) -> (i32, i32) {
    %c0_i32 = arith.constant 0 : i32
    %c0_i32_0 = arith.constant 0 : i32
    return %arg0, %c0_i32 : i32, i32
  }
  func.func @transform_1(%arg0: i32) -> (i32, i32) {
    %c0_i32 = arith.constant 0 : i32
    %c0_i32_0 = arith.constant 0 : i32
    return %arg0, %c0_i32 : i32, i32
  }
  func.func @transform_2(%arg0: i32) -> (i32, i32) {
    %c0_i32 = arith.constant 0 : i32
    %c0_i32_0 = arith.constant 0 : i32
    %c0_i32_1 = arith.constant 0 : i32
    return %c0_i32, %c0_i32_0 : i32, i32
  }
  func.func @transform_3(%arg0: i32) -> (i32, i32) {
    %c0_i32 = arith.constant 0 : i32
    %c0_i32_0 = arith.constant 0 : i32
    %c0_i32_1 = arith.constant 0 : i32
    return %c0_i32, %c0_i32_0 : i32, i32
  }
  func.func @transform_4(%arg0: i32) -> (i32, i32) {
    %c0_i32 = arith.constant 0 : i32
    %c0_i32_0 = arith.constant 0 : i32
    %c0_i32_1 = arith.constant 0 : i32
    return %c0_i32, %c0_i32_0 : i32, i32
  }
  func.func @transform_5(%arg0: i32) -> (i32, i32) {
    %c0_i32 = arith.constant 0 : i32
    %c0_i32_0 = arith.constant 0 : i32
    return %arg0, %c0_i32 : i32, i32
  }
}

</mosaic_0001>

<llo_original>
// kernel: tpu_custom_call.1
$region0: #{tpu_custom_call.1}
  #allocation0 [shape = 'u32[]', space=smem, size = 0x4, offset = 0x4, fixed_abs, tag = 'smem constant byte address 0x4 - core index']
  #allocation1 [shape = 'u32[144,128]{1,0:T(1,128)}', space=vmem, size = 0x12000, scoped, tag = 'internal scratch']
  %s0 = inlined_call_operand.vmem [shape: f32[128,16], index: 0, kind: input, shape index: {}]
  %s1 = inlined_call_operand.vmem [shape: f32[128,16], index: 1, kind: input, shape index: {}]
  %s2 = inlined_call_operand.vmem [shape: f32[1,32], index: 2, kind: input, shape index: {}]
  %s3 = inlined_call_operand.vmem [shape: f32[1,32], index: 3, kind: input, shape index: {}]
  %s4 = inlined_call_operand.vmem [shape: f32[32,16], index: 4, kind: input, shape index: {}]
  %s5 = inlined_call_operand.vmem [shape: f32[128,16], index: 5, kind: output, shape index: {}]
  %s6 = sld [smem:[#allocation0]]
  $region30: #{tpu_custom_call.1} parent=0
    _
  %s8 = ssub.s32 1, %s6
  %s9 = scalar_select 0, %s8, %s6
  // Predicated region
  $region2: #{tpu_custom_call.1} parent=0 // pred_check
    _
  $region3: #{tpu_custom_call.1} parent=0 // pred_check_branch
    %11 = sbr.rel (0) target = $region5
  $region4: #{tpu_custom_call.1} parent=0 // pred_region
    _
  $region5: #{tpu_custom_call.1} parent=0 // pred_fallthru
    _
  // Predicated region
  $region6: #{tpu_custom_call.1} parent=0 // pred_check
    _
  $region7: #{tpu_custom_call.1} parent=0 // pred_check_branch
    %13 = sbr.rel (0) target = $region9
  $region8: #{tpu_custom_call.1} parent=0 // pred_region
    _
  $region9: #{tpu_custom_call.1} parent=0 // pred_fallthru
    _
  // Predicated region
  $region10: #{tpu_custom_call.1} parent=0 // pred_check
    _
  $region11: #{tpu_custom_call.1} parent=0 // pred_check_branch
    %15 = sbr.rel (0) target = $region13
  $region12: #{tpu_custom_call.1} parent=0 // pred_region
    _
  $region13: #{tpu_custom_call.1} parent=0 // pred_fallthru
    _
  // Predicated region
  $region14: #{tpu_custom_call.1} parent=0 // pred_check
    _
  $region15: #{tpu_custom_call.1} parent=0 // pred_check_branch
    %17 = sbr.rel (0) target = $region17
  $region16: #{tpu_custom_call.1} parent=0 // pred_region
    _
  $region17: #{tpu_custom_call.1} parent=0 // pred_fallthru
    _
  // Predicated region
  $region18: #{tpu_custom_call.1} parent=0 // pred_check
    _
  $region19: #{tpu_custom_call.1} parent=0 // pred_check_branch
    %19 = sbr.rel (0) target = $region21
  $region20: #{tpu_custom_call.1} parent=0 // pred_region
    _
  $region21: #{tpu_custom_call.1} parent=0 // pred_fallthru
    _
  %v20 = vld [vmem:[%s0] sm:$0xff]
  %v21 = vld [vmem:[%s0 + $0x8] sm:$0xff]
  %v22 = vld [vmem:[%s0 + $0x10] sm:$0xff]
  %v23 = vld [vmem:[%s0 + $0x18] sm:$0xff]
  %v24 = vld [vmem:[%s0 + $0x20] sm:$0xff]
  %v25 = vld [vmem:[%s0 + $0x28] sm:$0xff]
  %v26 = vld [vmem:[%s0 + $0x30] sm:$0xff]
  %v27 = vld [vmem:[%s0 + $0x38] sm:$0xff]
  %v28 = vld [vmem:[%s0 + $0x40] sm:$0xff]
  %v29 = vld [vmem:[%s0 + $0x48] sm:$0xff]
  %v30 = vld [vmem:[%s0 + $0x50] sm:$0xff]
  %v31 = vld [vmem:[%s0 + $0x58] sm:$0xff]
  %v32 = vld [vmem:[%s0 + $0x60] sm:$0xff]
  %v33 = vld [vmem:[%s0 + $0x68] sm:$0xff]
  %v34 = vld [vmem:[%s0 + $0x70] sm:$0xff]
  %v35 = vld [vmem:[%s0 + $0x78] sm:$0xff]
  %v36 = vld [vmem:[%s1] sm:$0xff]
  %v37 = vld [vmem:[%s1 + $0x8] sm:$0xff]
  %v38 = vld [vmem:[%s1 + $0x10] sm:$0xff]
  %v39 = vld [vmem:[%s1 + $0x18] sm:$0xff]
  %v40 = vld [vmem:[%s1 + $0x20] sm:$0xff]
  %v41 = vld [vmem:[%s1 + $0x28] sm:$0xff]
  %v42 = vld [vmem:[%s1 + $0x30] sm:$0xff]
  %v43 = vld [vmem:[%s1 + $0x38] sm:$0xff]
  %v44 = vld [vmem:[%s1 + $0x40] sm:$0xff]
  %v45 = vld [vmem:[%s1 + $0x48] sm:$0xff]
  %v46 = vld [vmem:[%s1 + $0x50] sm:$0xff]
  %v47 = vld [vmem:[%s1 + $0x58] sm:$0xff]
  %v48 = vld [vmem:[%s1 + $0x60] sm:$0xff]
  %v49 = vld [vmem:[%s1 + $0x68] sm:$0xff]
  %v50 = vld [vmem:[%s1 + $0x70] sm:$0xff]
  %v51 = vld [vmem:[%s1 + $0x78] sm:$0xff]
  %68 = vrot.lane.b32.xlu0 %v36, 16
  %v69 = vpop.permute.xlu0 %68
  %70 = vrot.lane.b32.xlu0 %v37, 16
  %v71 = vpop.permute.xlu0 %70
  %72 = vrot.lane.b32.xlu0 %v38, 16
  %v73 = vpop.permute.xlu0 %72
  %74 = vrot.lane.b32.xlu0 %v39, 16
  %v75 = vpop.permute.xlu0 %74
  %76 = vrot.lane.b32.xlu0 %v40, 16
  %v77 = vpop.permute.xlu0 %76
  %78 = vrot.lane.b32.xlu0 %v41, 16
  %v79 = vpop.permute.xlu0 %78
  %80 = vrot.lane.b32.xlu0 %v42, 16
  %v81 = vpop.permute.xlu0 %80
  %82 = vrot.lane.b32.xlu0 %v43, 16
  %v83 = vpop.permute.xlu0 %82
  %84 = vrot.lane.b32.xlu0 %v44, 16
  %v85 = vpop.permute.xlu0 %84
  %86 = vrot.lane.b32.xlu0 %v45, 16
  %v87 = vpop.permute.xlu0 %86
  %88 = vrot.lane.b32.xlu0 %v46, 16
  %v89 = vpop.permute.xlu0 %88
  %90 = vrot.lane.b32.xlu0 %v47, 16
  %v91 = vpop.permute.xlu0 %90
  %92 = vrot.lane.b32.xlu0 %v48, 16
  %v93 = vpop.permute.xlu0 %92
  %94 = vrot.lane.b32.xlu0 %v49, 16
  %v95 = vpop.permute.xlu0 %94
  %96 = vrot.lane.b32.xlu0 %v50, 16
  %v97 = vpop.permute.xlu0 %96
  %98 = vrot.lane.b32.xlu0 %v51, 16
  %v99 = vpop.permute.xlu0 %98
  %vm116 = vcmask 130048
  %v117 = vsel %vm116, %v20, %v69
  %v118 = vsel %vm116, %v21, %v71
  %v119 = vsel %vm116, %v22, %v73
  %v120 = vsel %vm116, %v23, %v75
  %v121 = vsel %vm116, %v24, %v77
  %v122 = vsel %vm116, %v25, %v79
  %v123 = vsel %vm116, %v26, %v81
  %v124 = vsel %vm116, %v27, %v83
  %v125 = vsel %vm116, %v28, %v85
  %v126 = vsel %vm116, %v29, %v87
  %v127 = vsel %vm116, %v30, %v89
  %v128 = vsel %vm116, %v31, %v91
  %v129 = vsel %vm116, %v32, %v93
  %v130 = vsel %vm116, %v33, %v95
  %v131 = vsel %vm116, %v34, %v97
  %v132 = vsel %vm116, %v35, %v99
  %vm133 = vcmask 261120
  %v134 = vsel %vm133, %v117, 0.0
  %135 = vadd.xlane.f32.xlu0 %v134
  %v136 = vpop.xlane.xlu0 %135
  %v137 = vsel %vm133, %v118, 0.0
  %138 = vadd.xlane.f32.xlu0 %v137
  %v139 = vpop.xlane.xlu0 %138
  %v140 = vsel %vm133, %v119, 0.0
  %141 = vadd.xlane.f32.xlu0 %v140
  %v142 = vpop.xlane.xlu0 %141
  %v143 = vsel %vm133, %v120, 0.0
  %144 = vadd.xlane.f32.xlu0 %v143
  %v145 = vpop.xlane.xlu0 %144
  %v146 = vsel %vm133, %v121, 0.0
  %147 = vadd.xlane.f32.xlu0 %v146
  %v148 = vpop.xlane.xlu0 %147
  %v149 = vsel %vm133, %v122, 0.0
  %150 = vadd.xlane.f32.xlu0 %v149
  %v151 = vpop.xlane.xlu0 %150
  %v152 = vsel %vm133, %v123, 0.0
  %153 = vadd.xlane.f32.xlu0 %v152
  %v154 = vpop.xlane.xlu0 %153
  %v155 = vsel %vm133, %v124, 0.0
  %156 = vadd.xlane.f32.xlu0 %v155
  %v157 = vpop.xlane.xlu0 %156
  %v158 = vsel %vm133, %v125, 0.0
  %159 = vadd.xlane.f32.xlu0 %v158
  %v160 = vpop.xlane.xlu0 %159
  %v161 = vsel %vm133, %v126, 0.0
  %162 = vadd.xlane.f32.xlu0 %v161
  %v163 = vpop.xlane.xlu0 %162
  %v164 = vsel %vm133, %v127, 0.0
  %165 = vadd.xlane.f32.xlu0 %v164
  %v166 = vpop.xlane.xlu0 %165
  %v167 = vsel %vm133, %v128, 0.0
  %168 = vadd.xlane.f32.xlu0 %v167
  %v169 = vpop.xlane.xlu0 %168
  %v170 = vsel %vm133, %v129, 0.0
  %171 = vadd.xlane.f32.xlu0 %v170
  %v172 = vpop.xlane.xlu0 %171
  %v173 = vsel %vm133, %v130, 0.0
  %174 = vadd.xlane.f32.xlu0 %v173
  %v175 = vpop.xlane.xlu0 %174
  %v176 = vsel %vm133, %v131, 0.0
  %177 = vadd.xlane.f32.xlu0 %v176
  %v178 = vpop.xlane.xlu0 %177
  %v179 = vsel %vm133, %v132, 0.0
  %180 = vadd.xlane.f32.xlu0 %v179
  %v181 = vpop.xlane.xlu0 %180
  %v182 = vrcp.pop 32.0
  %v183 = vmul.f32 %v136, %v182
  %v184 = vmul.f32 %v139, %v182
  %v185 = vmul.f32 %v142, %v182
  %v186 = vmul.f32 %v145, %v182
  %v187 = vmul.f32 %v148, %v182
  %v188 = vmul.f32 %v151, %v182
  %v189 = vmul.f32 %v154, %v182
  %v190 = vmul.f32 %v157, %v182
  %v191 = vmul.f32 %v160, %v182
  %v192 = vmul.f32 %v163, %v182
  %v193 = vmul.f32 %v166, %v182
  %v194 = vmul.f32 %v169, %v182
  %v195 = vmul.f32 %v172, %v182
  %v196 = vmul.f32 %v175, %v182
  %v197 = vmul.f32 %v178, %v182
  %v198 = vmul.f32 %v181, %v182
  %v199 = vsub.f32 %v117, %v183
  %v200 = vsub.f32 %v118, %v184
  %v201 = vsub.f32 %v119, %v185
  %v202 = vsub.f32 %v120, %v186
  %v203 = vsub.f32 %v121, %v187
  %v204 = vsub.f32 %v122, %v188
  %v205 = vsub.f32 %v123, %v189
  %v206 = vsub.f32 %v124, %v190
  %v207 = vsub.f32 %v125, %v191
  %v208 = vsub.f32 %v126, %v192
  %v209 = vsub.f32 %v127, %v193
  %v210 = vsub.f32 %v128, %v194
  %v211 = vsub.f32 %v129, %v195
  %v212 = vsub.f32 %v130, %v196
  %v213 = vsub.f32 %v131, %v197
  %v214 = vsub.f32 %v132, %v198
  %v215 = vmul.f32 %v199, %v199
  %v216 = vmul.f32 %v200, %v200
  %v217 = vmul.f32 %v201, %v201
  %v218 = vmul.f32 %v202, %v202
  %v219 = vmul.f32 %v203, %v203
  %v220 = vmul.f32 %v204, %v204
  %v221 = vmul.f32 %v205, %v205
  %v222 = vmul.f32 %v206, %v206
  %v223 = vmul.f32 %v207, %v207
  %v224 = vmul.f32 %v208, %v208
  %v225 = vmul.f32 %v209, %v209
  %v226 = vmul.f32 %v210, %v210
  %v227 = vmul.f32 %v211, %v211
  %v228 = vmul.f32 %v212, %v212
  %v229 = vmul.f32 %v213, %v213
  %v230 = vmul.f32 %v214, %v214
  %v231 = vsel %vm133, %v215, 0.0
  %232 = vadd.xlane.f32.xlu0 %v231
  %v233 = vpop.xlane.xlu0 %232
  %v234 = vsel %vm133, %v216, 0.0
  %235 = vadd.xlane.f32.xlu0 %v234
  %v236 = vpop.xlane.xlu0 %235
  %v237 = vsel %vm133, %v217, 0.0
  %238 = vadd.xlane.f32.xlu0 %v237
  %v239 = vpop.xlane.xlu0 %238
  %v240 = vsel %vm133, %v218, 0.0
  %241 = vadd.xlane.f32.xlu0 %v240
  %v242 = vpop.xlane.xlu0 %241
  %v243 = vsel %vm133, %v219, 0.0
  %244 = vadd.xlane.f32.xlu0 %v243
  %v245 = vpop.xlane.xlu0 %244
  %v246 = vsel %vm133, %v220, 0.0
  %247 = vadd.xlane.f32.xlu0 %v246
  %v248 = vpop.xlane.xlu0 %247
  %v249 = vsel %vm133, %v221, 0.0
  %250 = vadd.xlane.f32.xlu0 %v249
  %v251 = vpop.xlane.xlu0 %250
  %v252 = vsel %vm133, %v222, 0.0
  %253 = vadd.xlane.f32.xlu0 %v252
  %v254 = vpop.xlane.xlu0 %253
  %v255 = vsel %vm133, %v223, 0.0
  %256 = vadd.xlane.f32.xlu0 %v255
  %v257 = vpop.xlane.xlu0 %256
  %v258 = vsel %vm133, %v224, 0.0
  %259 = vadd.xlane.f32.xlu0 %v258
  %v260 = vpop.xlane.xlu0 %259
  %v261 = vsel %vm133, %v225, 0.0
  %262 = vadd.xlane.f32.xlu0 %v261
  %v263 = vpop.xlane.xlu0 %262
  %v264 = vsel %vm133, %v226, 0.0
  %265 = vadd.xlane.f32.xlu0 %v264
  %v266 = vpop.xlane.xlu0 %265
  %v267 = vsel %vm133, %v227, 0.0
  %268 = vadd.xlane.f32.xlu0 %v267
  %v269 = vpop.xlane.xlu0 %268
  %v270 = vsel %vm133, %v228, 0.0
  %271 = vadd.xlane.f32.xlu0 %v270
  %v272 = vpop.xlane.xlu0 %271
  %v273 = vsel %vm133, %v229, 0.0
  %274 = vadd.xlane.f32.xlu0 %v273
  %v275 = vpop.xlane.xlu0 %274
  %v276 = vsel %vm133, %v230, 0.0
  %277 = vadd.xlane.f32.xlu0 %v276
  %v278 = vpop.xlane.xlu0 %277
  %v279 = vmul.f32 %v233, %v182
  %v280 = vmul.f32 %v236, %v182
  %v281 = vmul.f32 %v239, %v182
  %v282 = vmul.f32 %v242, %v182
  %v283 = vmul.f32 %v245, %v182
  %v284 = vmul.f32 %v248, %v182
  %v285 = vmul.f32 %v251, %v182
  %v286 = vmul.f32 %v254, %v182
  %v287 = vmul.f32 %v257, %v182
  %v288 = vmul.f32 %v260, %v182
  %v289 = vmul.f32 %v263, %v182
  %v290 = vmul.f32 %v266, %v182
  %v291 = vmul.f32 %v269, %v182
  %v292 = vmul.f32 %v272, %v182
  %v293 = vmul.f32 %v275, %v182
  %v294 = vmul.f32 %v278, %v182
  %v295 = vadd.f32 %v279, 1e-05
  %v296 = vadd.f32 %v280, 1e-05
  %v297 = vadd.f32 %v281, 1e-05
  %v298 = vadd.f32 %v282, 1e-05
  %v299 = vadd.f32 %v283, 1e-05
  %v300 = vadd.f32 %v284, 1e-05
  %v301 = vadd.f32 %v285, 1e-05
  %v302 = vadd.f32 %v286, 1e-05
  %v303 = vadd.f32 %v287, 1e-05
  %v304 = vadd.f32 %v288, 1e-05
  %v305 = vadd.f32 %v289, 1e-05
  %v306 = vadd.f32 %v290, 1e-05
  %v307 = vadd.f32 %v291, 1e-05
  %v308 = vadd.f32 %v292, 1e-05
  %v309 = vadd.f32 %v293, 1e-05
  %v310 = vadd.f32 %v294, 1e-05
  %v311 = vrsqrt.pop %v295
  %v312 = vrsqrt.pop %v296
  %v313 = vrsqrt.pop %v297
  %v314 = vrsqrt.pop %v298
  %v315 = vrsqrt.pop %v299
  %v316 = vrsqrt.pop %v300
  %v317 = vrsqrt.pop %v301
  %v318 = vrsqrt.pop %v302
  %v319 = vrsqrt.pop %v303
  %v320 = vrsqrt.pop %v304
  %v321 = vrsqrt.pop %v305
  %v322 = vrsqrt.pop %v306
  %v323 = vrsqrt.pop %v307
  %v324 = vrsqrt.pop %v308
  %v325 = vrsqrt.pop %v309
  %v326 = vrsqrt.pop %v310
  %v327 = vmul.f32 %v199, %v311
  %v328 = vmul.f32 %v200, %v312
  %v329 = vmul.f32 %v201, %v313
  %v330 = vmul.f32 %v202, %v314
  %v331 = vmul.f32 %v203, %v315
  %v332 = vmul.f32 %v204, %v316
  %v333 = vmul.f32 %v205, %v317
  %v334 = vmul.f32 %v206, %v318
  %v335 = vmul.f32 %v207, %v319
  %v336 = vmul.f32 %v208, %v320
  %v337 = vmul.f32 %v209, %v321
  %v338 = vmul.f32 %v210, %v322
  %v339 = vmul.f32 %v211, %v323
  %v340 = vmul.f32 %v212, %v324
  %v341 = vmul.f32 %v213, %v325
  %v342 = vmul.f32 %v214, %v326
  %v343 = vld [vmem:[%s2] sm:$0x1]
  %v345 = vlaneseq
  %v346 = vshrl.u32 %v345, 7
  %v347 = vsub.s32 0, %v346
  %v348 = vrot.slane %v343, %v347
  %v350 = vmul.f32 %v327, %v348
  %v351 = vmul.f32 %v328, %v348
  %v352 = vmul.f32 %v329, %v348
  %v353 = vmul.f32 %v330, %v348
  %v354 = vmul.f32 %v331, %v348
  %v355 = vmul.f32 %v332, %v348
  %v356 = vmul.f32 %v333, %v348
  %v357 = vmul.f32 %v334, %v348
  %v358 = vmul.f32 %v335, %v348
  %v359 = vmul.f32 %v336, %v348
  %v360 = vmul.f32 %v337, %v348
  %v361 = vmul.f32 %v338, %v348
  %v362 = vmul.f32 %v339, %v348
  %v363 = vmul.f32 %v340, %v348
  %v364 = vmul.f32 %v341, %v348
  %v365 = vmul.f32 %v342, %v348
  %v366 = vld [vmem:[%s3] sm:$0x1]
  %v368 = vlaneseq
  %v369 = vshrl.u32 %v368, 7
  %v370 = vsub.s32 0, %v369
  %v371 = vrot.slane %v366, %v370
  %v373 = vadd.f32 %v350, %v371
  %v374 = vadd.f32 %v351, %v371
  %v375 = vadd.f32 %v352, %v371
  %v376 = vadd.f32 %v353, %v371
  %v377 = vadd.f32 %v354, %v371
  %v378 = vadd.f32 %v355, %v371
  %v379 = vadd.f32 %v356, %v371
  %v380 = vadd.f32 %v357, %v371
  %v381 = vadd.f32 %v358, %v371
  %v382 = vadd.f32 %v359, %v371
  %v383 = vadd.f32 %v360, %v371
  %v384 = vadd.f32 %v361, %v371
  %v385 = vadd.f32 %v362, %v371
  %v386 = vadd.f32 %v363, %v371
  %v387 = vadd.f32 %v364, %v371
  %v388 = vadd.f32 %v365, %v371
  %v389 = vld [vmem:[%s4] sm:$0xff]
  %v390 = vld [vmem:[%s4 + $0x8] sm:$0xff]
  %v391 = vld [vmem:[%s4 + $0x10] sm:$0xff]
  %v392 = vld [vmem:[%s4 + $0x18] sm:$0xff]
  %v394 = vsel %vm133, %v373, 0
  %v397 = vsel %vm133, %v374, 0
  %v400 = vsel %vm133, %v375, 0
  %v403 = vsel %vm133, %v376, 0
  %v406 = vsel %vm133, %v377, 0
  %v409 = vsel %vm133, %v378, 0
  %v412 = vsel %vm133, %v379, 0
  %v415 = vsel %vm133, %v380, 0
  %v418 = vsel %vm133, %v381, 0
  %v421 = vsel %vm133, %v382, 0
  %v424 = vsel %vm133, %v383, 0
  %v427 = vsel %vm133, %v384, 0
  %v430 = vsel %vm133, %v385, 0
  %v433 = vsel %vm133, %v386, 0
  %v436 = vsel %vm133, %v387, 0
  %v439 = vsel %vm133, %v388, 0
  %441 = vmatprep.subr.mxu0 0.0
  %442 = vmatpush1.msra.mxu0 0.0
  %443 = vmatprep.subr.mxu0 0.0
  %444 = vmatpush1.msra.mxu0 0.0
  %445 = vmatprep.subr.mxu0 0.0
  %446 = vmatpush1.msra.mxu0 0.0
  %447 = vmatprep.subr.mxu0 0.0
  %448 = vmatpush1.msra.mxu0 0.0
  %449 = vmatprep.subr.mxu0 0.0
  %450 = vmatpush1.msra.mxu0 0.0
  %451 = vmatprep.subr.mxu0 0.0
  %452 = vmatpush1.msra.mxu0 0.0
  %453 = vmatprep.subr.mxu0 0.0
  %454 = vmatpush1.msra.mxu0 0.0
  %455 = vmatprep.subr.mxu0 0.0
  %456 = vmatpush1.msra.mxu0 0.0
  %457 = vmatprep.subr.mxu0 0.0
  %458 = vmatpush1.msra.mxu0 0.0
  %459 = vmatprep.subr.mxu0 0.0
  %460 = vmatpush1.msra.mxu0 0.0
  %461 = vmatprep.subr.mxu0 0.0
  %462 = vmatpush1.msra.mxu0 0.0
  %463 = vmatprep.subr.mxu0 0.0
  %464 = vmatpush1.msra.mxu0 0.0
  %465 = vmatprep.subr.mxu0 0.0
  %466 = vmatpush1.msra.mxu0 %v392
  %467 = vmatprep.subr.mxu0 0.0
  %468 = vmatpush1.msra.mxu0 %v391
  %469 = vmatprep.subr.mxu0 0.0
  %470 = vmatpush1.msra.mxu0 %v390
  %471 = vmatprep.subr.mxu0 0.0
  %472 = vmatpush1.msra.mxu0 %v389
  %473 = vmatprep.subr.mxu0 0.0
  %474 = vmatpush2.msra.mxu0 0.0
  %475 = vmatprep.subr.mxu0 0.0
  %476 = vmatpush2.msra.mxu0 0.0
  %477 = vmatprep.subr.mxu0 0.0
  %478 = vmatpush2.msra.mxu0 0.0
  %479 = vmatprep.subr.mxu0 0.0
  %480 = vmatpush2.msra.mxu0 0.0
  %481 = vmatprep.subr.mxu0 0.0
  %482 = vmatpush2.msra.mxu0 0.0
  %483 = vmatprep.subr.mxu0 0.0
  %484 = vmatpush2.msra.mxu0 0.0
  %485 = vmatprep.subr.mxu0 0.0
  %486 = vmatpush2.msra.mxu0 0.0
  %487 = vmatprep.subr.mxu0 0.0
  %488 = vmatpush2.msra.mxu0 0.0
  %489 = vmatprep.subr.mxu0 0.0
  %490 = vmatpush2.msra.mxu0 0.0
  %491 = vmatprep.subr.mxu0 0.0
  %492 = vmatpush2.msra.mxu0 0.0
  %493 = vmatprep.subr.mxu0 0.0
  %494 = vmatpush2.msra.mxu0 0.0
  %495 = vmatprep.subr.mxu0 0.0
  %496 = vmatpush2.msra.mxu0 0.0
  %497 = vmatprep.subr.mxu0 0.0
  %498 = vmatpush2.msra.mxu0 0.0
  %499 = vmatprep.subr.mxu0 0.0
  %500 = vmatpush2.msra.mxu0 0.0
  %501 = vmatprep.subr.mxu0 0.0
  %502 = vmatpush2.msra.mxu0 0.0
  %503 = vmatprep.subr.mxu0 0.0
  %504 = vmatpush2.msra.mxu0 0.0
  %505 = vmatprep.mubr.f32.mxu0 0.0
  %506 = vmatmul.mubr.f32.gmra.mxu0 %v394
  %v507 = vpop.f32.mrf.mxu0
  %v508 = vadd.f32 0.0, %v507
  %v509 = vpop.f32.mrf.mxu0
  %510 = vmatprep.mubr.f32.mxu0 0.0
  %511 = vmatmul.mubr.f32.gmra.mxu0 %v397
  %v512 = vpop.f32.mrf.mxu0
  %v513 = vadd.f32 0.0, %v512
  %v514 = vpop.f32.mrf.mxu0
  %515 = vmatprep.mubr.f32.mxu0 0.0
  %516 = vmatmul.mubr.f32.gmra.mxu0 %v400
  %v517 = vpop.f32.mrf.mxu0
  %v518 = vadd.f32 0.0, %v517
  %v519 = vpop.f32.mrf.mxu0
  %520 = vmatprep.mubr.f32.mxu0 0.0
  %521 = vmatmul.mubr.f32.gmra.mxu0 %v403
  %v522 = vpop.f32.mrf.mxu0
  %v523 = vadd.f32 0.0, %v522
  %v524 = vpop.f32.mrf.mxu0
  %525 = vmatprep.mubr.f32.mxu0 0.0
  %526 = vmatmul.mubr.f32.gmra.mxu0 %v406
  %v527 = vpop.f32.mrf.mxu0
  %v528 = vadd.f32 0.0, %v527
  %v529 = vpop.f32.mrf.mxu0
  %530 = vmatprep.mubr.f32.mxu0 0.0
  %531 = vmatmul.mubr.f32.gmra.mxu0 %v409
  %v532 = vpop.f32.mrf.mxu0
  %v533 = vadd.f32 0.0, %v532
  %v534 = vpop.f32.mrf.mxu0
  %535 = vmatprep.mubr.f32.mxu0 0.0
  %536 = vmatmul.mubr.f32.gmra.mxu0 %v412
  %v537 = vpop.f32.mrf.mxu0
  %v538 = vadd.f32 0.0, %v537
  %v539 = vpop.f32.mrf.mxu0
  %540 = vmatprep.mubr.f32.mxu0 0.0
  %541 = vmatmul.mubr.f32.gmra.mxu0 %v415
  %v542 = vpop.f32.mrf.mxu0
  %v543 = vadd.f32 0.0, %v542
  %v544 = vpop.f32.mrf.mxu0
  %545 = vmatprep.mubr.f32.mxu0 0.0
  %546 = vmatmul.mubr.f32.gmra.mxu0 %v418
  %v547 = vpop.f32.mrf.mxu0
  %v548 = vadd.f32 0.0, %v547
  %v549 = vpop.f32.mrf.mxu0
  %550 = vmatprep.mubr.f32.mxu0 0.0
  %551 = vmatmul.mubr.f32.gmra.mxu0 %v421
  %v552 = vpop.f32.mrf.mxu0
  %v553 = vadd.f32 0.0, %v552
  %v554 = vpop.f32.mrf.mxu0
  %555 = vmatprep.mubr.f32.mxu0 0.0
  %556 = vmatmul.mubr.f32.gmra.mxu0 %v424
  %v557 = vpop.f32.mrf.mxu0
  %v558 = vadd.f32 0.0, %v557
  %v559 = vpop.f32.mrf.mxu0
  %560 = vmatprep.mubr.f32.mxu0 0.0
  %561 = vmatmul.mubr.f32.gmra.mxu0 %v427
  %v562 = vpop.f32.mrf.mxu0
  %v563 = vadd.f32 0.0, %v562
  %v564 = vpop.f32.mrf.mxu0
  %565 = vmatprep.mubr.f32.mxu0 0.0
  %566 = vmatmul.mubr.f32.gmra.mxu0 %v430
  %v567 = vpop.f32.mrf.mxu0
  %v568 = vadd.f32 0.0, %v567
  %v569 = vpop.f32.mrf.mxu0
  %570 = vmatprep.mubr.f32.mxu0 0.0
  %571 = vmatmul.mubr.f32.gmra.mxu0 %v433
  %v572 = vpop.f32.mrf.mxu0
  %v573 = vadd.f32 0.0, %v572
  %v574 = vpop.f32.mrf.mxu0
  %575 = vmatprep.mubr.f32.mxu0 0.0
  %576 = vmatmul.mubr.f32.gmra.mxu0 %v436
  %v577 = vpop.f32.mrf.mxu0
  %v578 = vadd.f32 0.0, %v577
  %v579 = vpop.f32.mrf.mxu0
  %580 = vmatprep.mubr.f32.mxu0 0.0
  %581 = vmatmul.mubr.f32.gmra.mxu0 %v439
  %v582 = vpop.f32.mrf.mxu0
  %v583 = vadd.f32 0.0, %v582
  %v584 = vpop.f32.mrf.mxu0
  %585 = vdwg.mxu0
  %586 = vst.msk [vmem:[%s5] sm:$0xff] %vm116, %v508
  %587 = vst.msk [vmem:[%s5 + $0x8] sm:$0xff] %vm116, %v513
  %588 = vst.msk [vmem:[%s5 + $0x10] sm:$0xff] %vm116, %v518
  %589 = vst.msk [vmem:[%s5 + $0x18] sm:$0xff] %vm116, %v523
  %590 = vst.msk [vmem:[%s5 + $0x20] sm:$0xff] %vm116, %v528
  %591 = vst.msk [vmem:[%s5 + $0x28] sm:$0xff] %vm116, %v533
  %592 = vst.msk [vmem:[%s5 + $0x30] sm:$0xff] %vm116, %v538
  %593 = vst.msk [vmem:[%s5 + $0x38] sm:$0xff] %vm116, %v543
  %594 = vst.msk [vmem:[%s5 + $0x40] sm:$0xff] %vm116, %v548
  %595 = vst.msk [vmem:[%s5 + $0x48] sm:$0xff] %vm116, %v553
  %596 = vst.msk [vmem:[%s5 + $0x50] sm:$0xff] %vm116, %v558
  %597 = vst.msk [vmem:[%s5 + $0x58] sm:$0xff] %vm116, %v563
  %598 = vst.msk [vmem:[%s5 + $0x60] sm:$0xff] %vm116, %v568
  %599 = vst.msk [vmem:[%s5 + $0x68] sm:$0xff] %vm116, %v573
  %600 = vst.msk [vmem:[%s5 + $0x70] sm:$0xff] %vm116, %v578
  %601 = vst.msk [vmem:[%s5 + $0x78] sm:$0xff] %vm116, %v583
  // Predicated region
  $region22: #{tpu_custom_call.1} parent=0 // pred_check
    _
  $region23: #{tpu_custom_call.1} parent=0 // pred_check_branch
    %603 = sbr.rel (0) target = $region25
  $region24: #{tpu_custom_call.1} parent=0 // pred_region
    _
  $region25: #{tpu_custom_call.1} parent=0 // pred_fallthru
    _
  // Predicated region
  $region26: #{tpu_custom_call.1} parent=0 // pred_check
    _
  $region27: #{tpu_custom_call.1} parent=0 // pred_check_branch
    %605 = sbr.rel (0) target = $region29
  $region28: #{tpu_custom_call.1} parent=0 // pred_region
    _
  $region29: #{tpu_custom_call.1} parent=0 // pred_fallthru
    _

</llo_original>
